<compile_context>
chip_gen: v7x
topology: tpu7x:2x2x1
jax: 0.10.0
libtpu: 0.0.40
codegen_flags: <defaults>
</compile_context>

<pallas_src>
import functools

import jax
import jax.numpy as jnp
from jax.experimental import pallas as pl
from jax.experimental.pallas import tpu as pltpu

_LANES = 128
_SUBLANES = 8
_MAX_TILE_ROWS = 8192          # 8192 * 128 * 4 B = 4 MiB per f32 tile
_MIN_PALLAS_ELEMS = 64 * 1024  # below this, pure-JAX fallback is cheaper


def _group_sum(v):
    """(tr, 128) -> (8, 128) via plain vreg adds (no cross-sublane XLU reduce)."""
    tr = v.shape[0]
    return v.reshape(tr // _SUBLANES, _SUBLANES, _LANES).sum(axis=0)


def _lstm_loss_kernel(x_ref, out_ref,
                      acc_relu_first, acc_x_first,
                      acc_relu_second, acc_x_second,
                      *, batch, half):
    pid = pl.program_id(0)

    @pl.when(pid == 0)
    def _init():
        acc_relu_first[...] = jnp.zeros_like(acc_relu_first)
        acc_x_first[...] = jnp.zeros_like(acc_x_first)
        acc_relu_second[...] = jnp.zeros_like(acc_relu_second)
        acc_x_second[...] = jnp.zeros_like(acc_x_second)

    # Cast on load (accepts bf16 inputs; v5e has no bf16 VALU anyway).
    x = x_ref[...].astype(jnp.float32)       # (tile_rows, 128), interleaved cols
    tr = x.shape[0]
    tile_elems = tr * _LANES                  # static
    cut = 2 * half                            # static flat cut between halves

    tile_start = pid * tile_elems             # traced scalar
    full_first = (tile_start + tile_elems) <= cut
    full_second = tile_start >= cut           # padding beyond 2*batch is zero -> harmless

    r = jnp.maximum(x, 0.0)
    gs_r = _group_sum(r)                      # (8, 128) unmasked partials
    gs_x = _group_sum(x)

    @pl.when(full_first)
    def _fast_first():
        acc_relu_first[...] += gs_r
        acc_x_first[...] += gs_x

    @pl.when(full_second)
    def _fast_second():
        acc_relu_second[...] += gs_r
        acc_x_second[...] += gs_x

    @pl.when(jnp.logical_not(full_first | full_second))
    def _boundary():
        row = jax.lax.broadcasted_iota(jnp.int32, (tr, _LANES), 0)
        lane = jax.lax.broadcasted_iota(jnp.int32, (tr, _LANES), 1)
        g = tile_start + row * _LANES + lane           # global flat element index
        m_first = g < cut
        gr_f = _group_sum(jnp.where(m_first, r, 0.0))
        gx_f = _group_sum(jnp.where(m_first, x, 0.0))
        acc_relu_first[...] += gr_f
        acc_x_first[...] += gx_f
        acc_relu_second[...] += gs_r - gr_f            # second half = total - first
        acc_x_second[...] += gs_x - gx_f

    @pl.when(pid == pl.num_programs(0) - 1)
    def _finalize():
        # Lane parity == column: even lanes hold sim[:,0], odd lanes sim[:,1].
        lane = jax.lax.broadcasted_iota(jnp.int32, (_SUBLANES, _LANES), 1)
        even = (lane % 2) == 0

        sum_relu1_first = jnp.sum(jnp.where(even, 0.0, acc_relu_first[...]),
                                  keepdims=True)                       # (1, 1)
        sum_s0_first = jnp.sum(jnp.where(even, acc_x_first[...], 0.0),
                               keepdims=True)
        sum_relu0_second = jnp.sum(jnp.where(even, acc_relu_second[...], 0.0),
                                   keepdims=True)
        sum_s0_second = jnp.sum(jnp.where(even, acc_x_second[...], 0.0),
                                keepdims=True)

        n_first = jnp.float32(half)
        n_second = jnp.float32(batch - half)

        loss_posi = sum_relu1_first / n_first
        loss_nega = sum_relu0_second / n_second
        loss_balance1 = jnp.maximum(
            0.9 - (sum_s0_first / n_first - sum_s0_second / n_second), 0.0)
        # loss_balance2 is weighted 0.0 in the PyTorch module -> dropped.
        out_ref[...] = 0.1 * loss_nega + 0.1 * loss_posi + loss_balance1


def _loss_reference(sim):
    """Pure-JAX reference mirroring the PyTorch forward (also small-B fallback)."""
    sim = sim.astype(jnp.float32)
    bs = sim.shape[0]
    half = bs // 2
    s0 = sim[:, 0]
    s1 = sim[:, 1]
    relu = lambda v: jnp.maximum(v, 0.0)
    loss_posi = jnp.mean(relu(s1[:half]))
    loss_nega = jnp.mean(relu(s0[half:]))
    bal1 = relu(0.9 - (jnp.mean(s0[:half]) - jnp.mean(s0[half:])))
    bal2 = relu(0.9 - (jnp.mean(s1[half:]) - jnp.mean(s1[:half])))
    return 0.1 * loss_nega + 0.1 * loss_posi + 1.0 * bal1 + 0.0 * bal2


def lstm_loss(sim, target=None, margin=1, *,
              force_pallas=False, max_tile_rows=_MAX_TILE_ROWS):
    """Pallas implementation of lstm_loss.forward. Returns a scalar (f32)."""
    del target, margin  # unused by the forward, kept for API parity
    assert sim.ndim == 2 and sim.shape[1] == 2, "expected sim of shape (B, 2)"
    batch = sim.shape[0]
    half = batch // 2
    flat_n = 2 * batch

    # Small-batch fallback: pad/reshape + kernel launch is pure overhead here.
    if not force_pallas and flat_n < _MIN_PALLAS_ELEMS:
        return _loss_reference(sim)

    # ---- Wrapper-side layout: one interleaved, lane-dense, zero-padded slab ----
    assert max_tile_rows % _SUBLANES == 0
    rows = -(-flat_n // _LANES)                               # ceil(2B / 128)
    if rows <= max_tile_rows:
        tile_rows = max(_SUBLANES, -(-rows // _SUBLANES) * _SUBLANES)
    else:
        tile_rows = max_tile_rows
    padded_rows = -(-rows // tile_rows) * tile_rows
    assert padded_rows * _LANES < 2 ** 31, "flat index would overflow int32"
    num_tiles = padded_rows // tile_rows

    flat = sim.reshape(flat_n)                                # contiguous, copy-free
    pad = padded_rows * _LANES - flat_n
    if pad:
        flat = jnp.pad(flat, (0, pad))                        # zeros: inert in all sums
    slab = flat.reshape(padded_rows, _LANES)

    kernel = functools.partial(_lstm_loss_kernel, batch=batch, half=half)

    out = pl.pallas_call(
        kernel,
        out_shape=jax.ShapeDtypeStruct((1, 1), jnp.float32),
        grid=(num_tiles,),
        in_specs=[pl.BlockSpec((tile_rows, _LANES), lambda i: (i, 0))],
        out_specs=pl.BlockSpec((1, 1), lambda i: (0, 0)),
        scratch_shapes=[pltpu.VMEM((_SUBLANES, _LANES), jnp.float32)] * 4,
        compiler_params=pltpu.CompilerParams(
            dimension_semantics=("arbitrary",),
            vmem_limit_bytes=32 * 1024 * 1024,
        ),
    )(slab)
    return out[0, 0]


if __name__ == "__main__":
    key = jax.random.PRNGKey(0)
    k1, k2, k3, kt = jax.random.split(key, 4)

    # Primary case matching the module's usage: batch=8, 2 similarity columns.
    B = 8
    sim = jax.random.normal(k1, (B, 2), dtype=jnp.float32)
    target = jax.random.randint(kt, (B,), 0, 2)  # unused, API parity only

    loss = jax.block_until_ready(lstm_loss(sim, target, force_pallas=True))
    ref = _loss_reference(sim)
    assert jnp.allclose(loss, ref, atol=1e-5, rtol=1e-5), (loss, ref)

    # Default path (small-batch pure-JAX fallback) must agree too.
    loss_fb = jax.block_until_ready(lstm_loss(sim, target))
    assert jnp.allclose(loss_fb, ref, atol=1e-5, rtol=1e-5), (loss_fb, ref)

    # Odd batch spanning multiple 128-lane rows (boundary-mask path).
    B2 = 270
    sim2 = jax.random.normal(k2, (B2, 2), dtype=jnp.float32)
    loss2 = jax.block_until_ready(lstm_loss(sim2, force_pallas=True))
    ref2 = _loss_reference(sim2)
    assert jnp.allclose(loss2, ref2, atol=1e-5, rtol=1e-5), (loss2, ref2)

    # Multi-tile grid exercising fast-first, boundary, and fast-second tiles,
    # with bf16 input (cast-on-load) and small forced tiles.
    B3 = 2002
    sim3 = jax.random.normal(k3, (B3, 2), dtype=jnp.bfloat16)
    loss3 = jax.block_until_ready(
        lstm_loss(sim3, force_pallas=True, max_tile_rows=8))
    ref3 = _loss_reference(sim3)
    assert jnp.allclose(loss3, ref3, atol=1e-3, rtol=1e-3), (loss3, ref3)

    print("KERNEL_OK")
</pallas_src>

<mosaic_0001>
module attributes {stable_mosaic.version = 11 : i64} {
  func.func @_lstm_loss_kernel(%arg0: i32, %arg1: memref<8x128xf32, #tpu.memory_space<vmem>>, %arg2: memref<1x1xf32, #tpu.memory_space<vmem>>, %arg3: memref<8x128xf32, #tpu.memory_space<vmem>>, %arg4: memref<8x128xf32, #tpu.memory_space<vmem>>, %arg5: memref<8x128xf32, #tpu.memory_space<vmem>>, %arg6: memref<8x128xf32, #tpu.memory_space<vmem>>) attributes {dimension_semantics = [#tpu.dimension_semantics<arbitrary>], iteration_bounds = array<i64: 1>, scalar_prefetch = 0 : i64, scratch_operands = 4 : i64, tpu.core_type = #tpu.core_type<tc>, window_params = [{transform_indices = @transform_0, window_bounds = array<i64: 8, 128>}, {pipeline_mode = #tpu.pipeline_mode<synchronous>, transform_indices = @transform_1, window_bounds = array<i64: 1, 1>}]} {
    %c0_i32 = arith.constant 0 : i32
    %0 = arith.cmpi eq, %arg0, %c0_i32 : i32
    %1 = arith.extui %0 : i1 to i32
    %c0_i32_0 = arith.constant 0 : i32
    %2 = arith.cmpi ne, %1, %c0_i32_0 : i32
    scf.if %2 {
      %cst_11 = arith.constant 0.000000e+00 : f32
      %25 = vector.broadcast %cst_11 : f32 to vector<8x128xf32>
      %c0_12 = arith.constant 0 : index
      %c0_13 = arith.constant 0 : index
      %26 = vector.load %arg3[%c0_12, %c0_13] : memref<8x128xf32, #tpu.memory_space<vmem>>, vector<8x128xf32>
      tpu.vector_store %arg3[%c0_12, %c0_13], %25 {strides = array<i32>} : memref<8x128xf32, #tpu.memory_space<vmem>>, vector<8x128xf32>,
      %cst_14 = arith.constant 0.000000e+00 : f32
      %27 = vector.broadcast %cst_14 : f32 to vector<8x128xf32>
      %c0_15 = arith.constant 0 : index
      %c0_16 = arith.constant 0 : index
      %28 = vector.load %arg4[%c0_15, %c0_16] : memref<8x128xf32, #tpu.memory_space<vmem>>, vector<8x128xf32>
      tpu.vector_store %arg4[%c0_15, %c0_16], %27 {strides = array<i32>} : memref<8x128xf32, #tpu.memory_space<vmem>>, vector<8x128xf32>,
      %cst_17 = arith.constant 0.000000e+00 : f32
      %29 = vector.broadcast %cst_17 : f32 to vector<8x128xf32>
      %c0_18 = arith.constant 0 : index
      %c0_19 = arith.constant 0 : index
      %30 = vector.load %arg5[%c0_18, %c0_19] : memref<8x128xf32, #tpu.memory_space<vmem>>, vector<8x128xf32>
      tpu.vector_store %arg5[%c0_18, %c0_19], %29 {strides = array<i32>} : memref<8x128xf32, #tpu.memory_space<vmem>>, vector<8x128xf32>,
      %cst_20 = arith.constant 0.000000e+00 : f32
      %31 = vector.broadcast %cst_20 : f32 to vector<8x128xf32>
      %c0_21 = arith.constant 0 : index
      %c0_22 = arith.constant 0 : index
      %32 = vector.load %arg6[%c0_21, %c0_22] : memref<8x128xf32, #tpu.memory_space<vmem>>, vector<8x128xf32>
      tpu.vector_store %arg6[%c0_21, %c0_22], %31 {strides = array<i32>} : memref<8x128xf32, #tpu.memory_space<vmem>>, vector<8x128xf32>,
    } else {
    }
    %c0 = arith.constant 0 : index
    %c0_1 = arith.constant 0 : index
    %3 = vector.load %arg1[%c0, %c0_1] : memref<8x128xf32, #tpu.memory_space<vmem>>, vector<8x128xf32>
    %c1024_i32 = arith.constant 1024 : i32
    %4 = arith.muli %arg0, %c1024_i32 : i32
    %c1024_i32_2 = arith.constant 1024 : i32
    %5 = arith.addi %4, %c1024_i32_2 : i32
    %c8_i32 = arith.constant 8 : i32
    %6 = arith.cmpi sle, %5, %c8_i32 : i32
    %c8_i32_3 = arith.constant 8 : i32
    %7 = arith.cmpi sge, %4, %c8_i32_3 : i32
    %cst = arith.constant 0.000000e+00 : f32
    %8 = vector.broadcast %cst : f32 to vector<8x128xf32>
    %9 = arith.maximumf %3, %8 : vector<8x128xf32>
    %10 = vector.shape_cast %9 : vector<8x128xf32> to vector<1x8x128xf32>
    %cst_4 = arith.constant dense<0.000000e+00> : vector<8x128xf32>
    %11 = vector.multi_reduction <add>, %10, %cst_4 [0] : vector<1x8x128xf32> to vector<8x128xf32>
    %12 = vector.shape_cast %3 : vector<8x128xf32> to vector<1x8x128xf32>
    %cst_5 = arith.constant dense<0.000000e+00> : vector<8x128xf32>
    %13 = vector.multi_reduction <add>, %12, %cst_5 [0] : vector<1x8x128xf32> to vector<8x128xf32>
    %14 = arith.extui %6 : i1 to i32
    %c0_i32_6 = arith.constant 0 : i32
    %15 = arith.cmpi ne, %14, %c0_i32_6 : i32
    scf.if %15 {
      %c0_11 = arith.constant 0 : index
      %c0_12 = arith.constant 0 : index
      %25 = vector.load %arg3[%c0_11, %c0_12] : memref<8x128xf32, #tpu.memory_space<vmem>>, vector<8x128xf32>
      %26 = arith.addf %25, %11 : vector<8x128xf32>
      %c0_13 = arith.constant 0 : index
      %c0_14 = arith.constant 0 : index
      %27 = vector.load %arg3[%c0_13, %c0_14] : memref<8x128xf32, #tpu.memory_space<vmem>>, vector<8x128xf32>
      tpu.vector_store %arg3[%c0_13, %c0_14], %26 {strides = array<i32>} : memref<8x128xf32, #tpu.memory_space<vmem>>, vector<8x128xf32>,
      %c0_15 = arith.constant 0 : index
      %c0_16 = arith.constant 0 : index
      %28 = vector.load %arg4[%c0_15, %c0_16] : memref<8x128xf32, #tpu.memory_space<vmem>>, vector<8x128xf32>
      %29 = arith.addf %28, %13 : vector<8x128xf32>
      %c0_17 = arith.constant 0 : index
      %c0_18 = arith.constant 0 : index
      %30 = vector.load %arg4[%c0_17, %c0_18] : memref<8x128xf32, #tpu.memory_space<vmem>>, vector<8x128xf32>
      tpu.vector_store %arg4[%c0_17, %c0_18], %29 {strides = array<i32>} : memref<8x128xf32, #tpu.memory_space<vmem>>, vector<8x128xf32>,
    } else {
    }
    %16 = arith.extui %7 : i1 to i32
    %c0_i32_7 = arith.constant 0 : i32
    %17 = arith.cmpi ne, %16, %c0_i32_7 : i32
    scf.if %17 {
      %c0_11 = arith.constant 0 : index
      %c0_12 = arith.constant 0 : index
      %25 = vector.load %arg5[%c0_11, %c0_12] : memref<8x128xf32, #tpu.memory_space<vmem>>, vector<8x128xf32>
      %26 = arith.addf %25, %11 : vector<8x128xf32>
      %c0_13 = arith.constant 0 : index
      %c0_14 = arith.constant 0 : index
      %27 = vector.load %arg5[%c0_13, %c0_14] : memref<8x128xf32, #tpu.memory_space<vmem>>, vector<8x128xf32>
      tpu.vector_store %arg5[%c0_13, %c0_14], %26 {strides = array<i32>} : memref<8x128xf32, #tpu.memory_space<vmem>>, vector<8x128xf32>,
      %c0_15 = arith.constant 0 : index
      %c0_16 = arith.constant 0 : index
      %28 = vector.load %arg6[%c0_15, %c0_16] : memref<8x128xf32, #tpu.memory_space<vmem>>, vector<8x128xf32>
      %29 = arith.addf %28, %13 : vector<8x128xf32>
      %c0_17 = arith.constant 0 : index
      %c0_18 = arith.constant 0 : index
      %30 = vector.load %arg6[%c0_17, %c0_18] : memref<8x128xf32, #tpu.memory_space<vmem>>, vector<8x128xf32>
      tpu.vector_store %arg6[%c0_17, %c0_18], %29 {strides = array<i32>} : memref<8x128xf32, #tpu.memory_space<vmem>>, vector<8x128xf32>,
    } else {
    }
    %18 = arith.ori %6, %7 : i1
    %true = arith.constant true
    %19 = arith.xori %18, %true : i1
    %20 = arith.extui %19 : i1 to i32
    %c0_i32_8 = arith.constant 0 : i32
    %21 = arith.cmpi ne, %20, %c0_i32_8 : i32
    scf.if %21 {
      %25 = tpu.iota {dimensions = array<i32: 0>} : vector<8x128xi32>
      %26 = tpu.iota {dimensions = array<i32: 1>} : vector<8x128xi32>
      %c128_i32 = arith.constant 128 : i32
      %27 = vector.broadcast %c128_i32 : i32 to vector<8x128xi32>
      %28 = arith.muli %25, %27 : vector<8x128xi32>
      %29 = vector.broadcast %4 : i32 to vector<8x128xi32>
      %30 = arith.addi %29, %28 : vector<8x128xi32>
      %31 = arith.addi %30, %26 : vector<8x128xi32>
      %c8_i32_11 = arith.constant 8 : i32
      %32 = vector.broadcast %c8_i32_11 : i32 to vector<8x128xi32>
      %33 = arith.cmpi slt, %31, %32 : vector<8x128xi32>
      %cst_12 = arith.constant 0.000000e+00 : f32
      %34 = vector.broadcast %cst_12 : f32 to vector<8x128xf32>
      %35 = arith.select %33, %9, %34 : vector<8x128xi1>, vector<8x128xf32>
      %36 = vector.shape_cast %35 : vector<8x128xf32> to vector<1x8x128xf32>
      %cst_13 = arith.constant dense<0.000000e+00> : vector<8x128xf32>
      %37 = vector.multi_reduction <add>, %36, %cst_13 [0] : vector<1x8x128xf32> to vector<8x128xf32>
      %cst_14 = arith.constant 0.000000e+00 : f32
      %38 = vector.broadcast %cst_14 : f32 to vector<8x128xf32>
      %39 = arith.select %33, %3, %38 : vector<8x128xi1>, vector<8x128xf32>
      %40 = vector.shape_cast %39 : vector<8x128xf32> to vector<1x8x128xf32>
      %cst_15 = arith.constant dense<0.000000e+00> : vector<8x128xf32>
      %41 = vector.multi_reduction <add>, %40, %cst_15 [0] : vector<1x8x128xf32> to vector<8x128xf32>
      %c0_16 = arith.constant 0 : index
      %c0_17 = arith.constant 0 : index
      %42 = vector.load %arg3[%c0_16, %c0_17] : memref<8x128xf32, #tpu.memory_space<vmem>>, vector<8x128xf32>
      %43 = arith.addf %42, %37 : vector<8x128xf32>
      %c0_18 = arith.constant 0 : index
      %c0_19 = arith.constant 0 : index
      %44 = vector.load %arg3[%c0_18, %c0_19] : memref<8x128xf32, #tpu.memory_space<vmem>>, vector<8x128xf32>
      tpu.vector_store %arg3[%c0_18, %c0_19], %43 {strides = array<i32>} : memref<8x128xf32, #tpu.memory_space<vmem>>, vector<8x128xf32>,
      %c0_20 = arith.constant 0 : index
      %c0_21 = arith.constant 0 : index
      %45 = vector.load %arg4[%c0_20, %c0_21] : memref<8x128xf32, #tpu.memory_space<vmem>>, vector<8x128xf32>
      %46 = arith.addf %45, %41 : vector<8x128xf32>
      %c0_22 = arith.constant 0 : index
      %c0_23 = arith.constant 0 : index
      %47 = vector.load %arg4[%c0_22, %c0_23] : memref<8x128xf32, #tpu.memory_space<vmem>>, vector<8x128xf32>
      tpu.vector_store %arg4[%c0_22, %c0_23], %46 {strides = array<i32>} : memref<8x128xf32, #tpu.memory_space<vmem>>, vector<8x128xf32>,
      %c0_24 = arith.constant 0 : index
      %c0_25 = arith.constant 0 : index
      %48 = vector.load %arg5[%c0_24, %c0_25] : memref<8x128xf32, #tpu.memory_space<vmem>>, vector<8x128xf32>
      %49 = arith.subf %11, %37 : vector<8x128xf32>
      %50 = arith.addf %48, %49 : vector<8x128xf32>
      %c0_26 = arith.constant 0 : index
      %c0_27 = arith.constant 0 : index
      %51 = vector.load %arg5[%c0_26, %c0_27] : memref<8x128xf32, #tpu.memory_space<vmem>>, vector<8x128xf32>
      tpu.vector_store %arg5[%c0_26, %c0_27], %50 {strides = array<i32>} : memref<8x128xf32, #tpu.memory_space<vmem>>, vector<8x128xf32>,
      %c0_28 = arith.constant 0 : index
      %c0_29 = arith.constant 0 : index
      %52 = vector.load %arg6[%c0_28, %c0_29] : memref<8x128xf32, #tpu.memory_space<vmem>>, vector<8x128xf32>
      %53 = arith.subf %13, %41 : vector<8x128xf32>
      %54 = arith.addf %52, %53 : vector<8x128xf32>
      %c0_30 = arith.constant 0 : index
      %c0_31 = arith.constant 0 : index
      %55 = vector.load %arg6[%c0_30, %c0_31] : memref<8x128xf32, #tpu.memory_space<vmem>>, vector<8x128xf32>
      tpu.vector_store %arg6[%c0_30, %c0_31], %54 {strides = array<i32>} : memref<8x128xf32, #tpu.memory_space<vmem>>, vector<8x128xf32>,
    } else {
    }
    %c0_i32_9 = arith.constant 0 : i32
    %22 = arith.cmpi eq, %arg0, %c0_i32_9 : i32
    %23 = arith.extui %22 : i1 to i32
    %c0_i32_10 = arith.constant 0 : i32
    %24 = arith.cmpi ne, %23, %c0_i32_10 : i32
    scf.if %24 {
      %25 = tpu.iota {dimensions = array<i32: 1>} : vector<8x128xi32>
      %c2_i32 = arith.constant 2 : i32
      %c0_i32_11 = arith.constant 0 : i32
      %26 = arith.cmpi eq, %c2_i32, %c0_i32_11 : i32
      %c1_i32 = arith.constant 1 : i32
      %27 = arith.select %26, %c1_i32, %c2_i32 : i32
      %28 = vector.broadcast %27 : i32 to vector<8x128xi32>
      %29 = arith.remsi %25, %28 : vector<8x128xi32>
      %c0_i32_12 = arith.constant 0 : i32
      %30 = vector.broadcast %c0_i32_12 : i32 to vector<8x128xi32>
      %31 = arith.cmpi ne, %29, %30 : vector<8x128xi32>
      %c0_i32_13 = arith.constant 0 : i32
      %32 = vector.broadcast %c0_i32_13 : i32 to vector<8x128xi32>
      %33 = arith.cmpi slt, %29, %32 : vector<8x128xi32>
      %c0_i32_14 = arith.constant 0 : i32
      %34 = arith.cmpi slt, %27, %c0_i32_14 : i32
      %35 = vector.broadcast %34 : i1 to vector<8x128xi1>
      %36 = vector.broadcast %35 : vector<8x128xi1> to vector<8x128xi1>
      %37 = arith.xori %33, %36 : vector<8x128xi1>
      %38 = arith.andi %37, %31 : vector<8x128xi1>
      %39 = vector.broadcast %27 : i32 to vector<8x128xi32>
      %40 = arith.addi %29, %39 : vector<8x128xi32>
      %41 = arith.select %38, %40, %29 : vector<8x128xi1>, vector<8x128xi32>
      %c0_i32_15 = arith.constant 0 : i32
      %42 = vector.broadcast %c0_i32_15 : i32 to vector<8x128xi32>
      %43 = arith.cmpi eq, %41, %42 : vector<8x128xi32>
      %c0_16 = arith.constant 0 : index
      %c0_17 = arith.constant 0 : index
      %44 = vector.load %arg3[%c0_16, %c0_17] : memref<8x128xf32, #tpu.memory_space<vmem>>, vector<8x128xf32>
      %cst_18 = arith.constant 0.000000e+00 : f32
      %45 = vector.broadcast %cst_18 : f32 to vector<8x128xf32>
      %46 = arith.select %43, %45, %44 : vector<8x128xi1>, vector<8x128xf32>
      %47 = vector.shape_cast %46 : vector<8x128xf32> to vector<1x8x128xf32>
      %cst_19 = arith.constant dense<0.000000e+00> : vector<1xf32>
      %48 = vector.multi_reduction <add>, %47, %cst_19 [1, 2] : vector<1x8x128xf32> to vector<1xf32>
      %49 = vector.shape_cast %48 : vector<1xf32> to vector<1x1x1xf32>
      %50 = vector.extract %49[0, 0, 0] : f32 from vector<1x1x1xf32>
      %51 = vector.broadcast %50 : f32 to vector<1x1xf32>
      %c0_20 = arith.constant 0 : index
      %c0_21 = arith.constant 0 : index
      %52 = vector.load %arg4[%c0_20, %c0_21] : memref<8x128xf32, #tpu.memory_space<vmem>>, vector<8x128xf32>
      %cst_22 = arith.constant 0.000000e+00 : f32
      %53 = vector.broadcast %cst_22 : f32 to vector<8x128xf32>
      %54 = arith.select %43, %52, %53 : vector<8x128xi1>, vector<8x128xf32>
      %55 = vector.shape_cast %54 : vector<8x128xf32> to vector<1x8x128xf32>
      %cst_23 = arith.constant dense<0.000000e+00> : vector<1xf32>
      %56 = vector.multi_reduction <add>, %55, %cst_23 [1, 2] : vector<1x8x128xf32> to vector<1xf32>
      %57 = vector.shape_cast %56 : vector<1xf32> to vector<1x1x1xf32>
      %58 = vector.extract %57[0, 0, 0] : f32 from vector<1x1x1xf32>
      %59 = vector.broadcast %58 : f32 to vector<1x1xf32>
      %c0_24 = arith.constant 0 : index
      %c0_25 = arith.constant 0 : index
      %60 = vector.load %arg5[%c0_24, %c0_25] : memref<8x128xf32, #tpu.memory_space<vmem>>, vector<8x128xf32>
      %cst_26 = arith.constant 0.000000e+00 : f32
      %61 = vector.broadcast %cst_26 : f32 to vector<8x128xf32>
      %62 = arith.select %43, %60, %61 : vector<8x128xi1>, vector<8x128xf32>
      %63 = vector.shape_cast %62 : vector<8x128xf32> to vector<1x8x128xf32>
      %cst_27 = arith.constant dense<0.000000e+00> : vector<1xf32>
      %64 = vector.multi_reduction <add>, %63, %cst_27 [1, 2] : vector<1x8x128xf32> to vector<1xf32>
      %65 = vector.shape_cast %64 : vector<1xf32> to vector<1x1x1xf32>
      %66 = vector.extract %65[0, 0, 0] : f32 from vector<1x1x1xf32>
      %67 = vector.broadcast %66 : f32 to vector<1x1xf32>
      %c0_28 = arith.constant 0 : index
      %c0_29 = arith.constant 0 : index
      %68 = vector.load %arg6[%c0_28, %c0_29] : memref<8x128xf32, #tpu.memory_space<vmem>>, vector<8x128xf32>
      %cst_30 = arith.constant 0.000000e+00 : f32
      %69 = vector.broadcast %cst_30 : f32 to vector<8x128xf32>
      %70 = arith.select %43, %68, %69 : vector<8x128xi1>, vector<8x128xf32>
      %71 = vector.shape_cast %70 : vector<8x128xf32> to vector<1x8x128xf32>
      %cst_31 = arith.constant dense<0.000000e+00> : vector<1xf32>
      %72 = vector.multi_reduction <add>, %71, %cst_31 [1, 2] : vector<1x8x128xf32> to vector<1xf32>
      %73 = vector.shape_cast %72 : vector<1xf32> to vector<1x1x1xf32>
      %74 = vector.extract %73[0, 0, 0] : f32 from vector<1x1x1xf32>
      %75 = vector.broadcast %74 : f32 to vector<1x1xf32>
      %cst_32 = arith.constant 4.000000e+00 : f32
      %76 = vector.broadcast %cst_32 : f32 to vector<1x1xf32>
      %77 = arith.divf %51, %76 : vector<1x1xf32>
      %cst_33 = arith.constant 4.000000e+00 : f32
      %78 = vector.broadcast %cst_33 : f32 to vector<1x1xf32>
      %79 = arith.divf %67, %78 : vector<1x1xf32>
      %cst_34 = arith.constant 4.000000e+00 : f32
      %80 = vector.broadcast %cst_34 : f32 to vector<1x1xf32>
      %81 = arith.divf %59, %80 : vector<1x1xf32>
      %cst_35 = arith.constant 4.000000e+00 : f32
      %82 = vector.broadcast %cst_35 : f32 to vector<1x1xf32>
      %83 = arith.divf %75, %82 : vector<1x1xf32>
      %84 = arith.subf %81, %83 : vector<1x1xf32>
      %cst_36 = arith.constant 0.899999976 : f32
      %85 = vector.broadcast %cst_36 : f32 to vector<1x1xf32>
      %86 = arith.subf %85, %84 : vector<1x1xf32>
      %cst_37 = arith.constant 0.000000e+00 : f32
      %87 = vector.broadcast %cst_37 : f32 to vector<1x1xf32>
      %88 = arith.maximumf %86, %87 : vector<1x1xf32>
      %cst_38 = arith.constant 1.000000e-01 : f32
      %89 = vector.broadcast %cst_38 : f32 to vector<1x1xf32>
      %90 = arith.mulf %89, %79 : vector<1x1xf32>
      %cst_39 = arith.constant 1.000000e-01 : f32
      %91 = vector.broadcast %cst_39 : f32 to vector<1x1xf32>
      %92 = arith.mulf %91, %77 : vector<1x1xf32>
      %93 = arith.addf %90, %92 : vector<1x1xf32>
      %94 = arith.addf %93, %88 : vector<1x1xf32>
      %c0_40 = arith.constant 0 : index
      %c0_41 = arith.constant 0 : index
      %95 = vector.load %arg2[%c0_40, %c0_41] : memref<1x1xf32, #tpu.memory_space<vmem>>, vector<1x1xf32>
      tpu.vector_store %arg2[%c0_40, %c0_41], %94 {strides = array<i32>} : memref<1x1xf32, #tpu.memory_space<vmem>>, vector<1x1xf32>,
    } else {
    }
    return
  }
  func.func @transform_0(%arg0: i32) -> (i32, i32) {
    %c0_i32 = arith.constant 0 : i32
    %c0_i32_0 = arith.constant 0 : i32
    return %arg0, %c0_i32 : i32, i32
  }
  func.func @transform_1(%arg0: i32) -> (i32, i32) {
    %c0_i32 = arith.constant 0 : i32
    %c0_i32_0 = arith.constant 0 : i32
    %c0_i32_1 = arith.constant 0 : i32
    return %c0_i32, %c0_i32_0 : i32, i32
  }
}

</mosaic_0001>

<llo_original>
// kernel: tpu_custom_call.1
$region0: #{tpu_custom_call.1}
  #allocation0 [shape = 'u32[]', space=smem, size = 0x4, offset = 0x4, fixed_abs, tag = 'smem constant byte address 0x4 - core index']
  #allocation1 [shape = 'u32[144,128]{1,0:T(1,128)}', space=vmem, size = 0x12000, scoped, tag = 'internal scratch']
  #allocation2 [shape = 'f32[8,128]{1,0:T(8,128)}', space=vmem, size = 0x1000, scoped, tag = 'scratch operand']
  #allocation3 [shape = 'f32[8,128]{1,0:T(8,128)}', space=vmem, size = 0x1000, scoped, tag = 'scratch operand']
  #allocation4 [shape = 'f32[8,128]{1,0:T(8,128)}', space=vmem, size = 0x1000, scoped, tag = 'scratch operand']
  #allocation5 [shape = 'f32[8,128]{1,0:T(8,128)}', space=vmem, size = 0x1000, scoped, tag = 'scratch operand']
  %s0 = inlined_call_operand.hbm [shape: f32[8,128], index: 0, kind: input, shape index: {}]
  %s1 = inlined_call_operand.hbm [shape: f32[1,1], index: 1, kind: output, shape index: {}]
  %s2 = sld [smem:[#allocation0]]
  $region38: #{tpu_custom_call.1} parent=0
    _
  %s4 = ssub.s32 1, %s2
  %s5 = scalar_select 0, %s4, %s2
  $region1: #{tpu_custom_call.1} parent=0
    #allocation6 [shape = 'u8[4096]{0}', space=vmem, size = 0x1000, scoped, tag = 'input window, operand 0, single buffered']
    #allocation7 [shape = 's32[1]{0}', space=sflag, size = 0x4, scoped, tag = 'scoped memory for tpu_custom_call.1']
    #allocation8 [shape = 's32[1]{0}', space=sflag, size = 0x4, scoped, tag = 'scoped memory for tpu_custom_call.1']
    #allocation9 [shape = 'u8[512]{0}', space=vmem, size = 0x400, scoped, tag = 'output window, operand 0, single buffered']
    %6 = vsyncpa [#allocation7], 0
    %7 = vsyncpa [#allocation8], 0
    // Predicated region
    $region2: #{tpu_custom_call.1} parent=1 // pred_check
      _
    $region3: #{tpu_custom_call.1} parent=1 // pred_check_branch
      %9 = sbr.rel (0) target = $region5
    $region4: #{tpu_custom_call.1} parent=1 // pred_region
      %s11 = ssub.s32 128, 128
      %12 = vsyncadd [#allocation7], %s11
      %s14 = sshll.u32 [#allocation6], 4
      %s15 = int_to_ptr.vmem [resolvable:$true] %s14
      %17 = dma.hbm_to_vmem [thread:$0]  %s0, 128, %s15, [#allocation7]
    $region5: #{tpu_custom_call.1} parent=1 // pred_fallthru
      _
    // Predicated region
    $region6: #{tpu_custom_call.1} parent=1 // pred_check
      _
    $region7: #{tpu_custom_call.1} parent=1 // pred_check_branch
      %19 = sbr.rel (0) target = $region9
    $region8: #{tpu_custom_call.1} parent=1 // pred_region
      %20 = dma.done [#allocation7], 128
    $region9: #{tpu_custom_call.1} parent=1 // pred_fallthru
      _
    %p21 = scmp.eq.s32.totalorder 0, 0
    // Predicated region
    $region10: #{tpu_custom_call.1} parent=1 // pred_check
      %p22 = pneg %p21
    $region11: #{tpu_custom_call.1} parent=1 // pred_check_branch
      %24 = sbr.rel (%p22) target = $region13
    $region12: #{tpu_custom_call.1} parent=1 // pred_region
      %25 = vst [vmem:[#allocation2] sm:$0xff] 0.0
      %26 = vst [vmem:[#allocation3] sm:$0xff] 0.0
      %27 = vst [vmem:[#allocation4] sm:$0xff] 0.0
      %28 = vst [vmem:[#allocation5] sm:$0xff] 0.0
    $region13: #{tpu_custom_call.1} parent=1 // pred_fallthru
      _
    %v29 = vld [vmem:[#allocation6] sm:$0xff]
    %s30 = smul.u32 0, 1024
    %s31 = sadd.s32 %s30, 1024
    %p32 = scmp.le.s32.totalorder %s31, 8
    %p33 = scmp.ge.s32.totalorder %s30, 8
    %v34 = vmax.f32 %v29, 0.0
    %v35 = vadd.f32 %v34, 0.0
    %v36 = vadd.f32 %v29, 0.0
    // Predicated region
    $region14: #{tpu_custom_call.1} parent=1 // pred_check
      %p37 = pneg %p32
    $region15: #{tpu_custom_call.1} parent=1 // pred_check_branch
      %39 = sbr.rel (%p37) target = $region17
    $region16: #{tpu_custom_call.1} parent=1 // pred_region
      %v40 = vld [vmem:[#allocation2] sm:$0xff]
      %v41 = vadd.f32 %v40, %v35
      %42 = vst [vmem:[#allocation2] sm:$0xff] %v41
      %v43 = vld [vmem:[#allocation3] sm:$0xff]
      %v44 = vadd.f32 %v43, %v36
      %45 = vst [vmem:[#allocation3] sm:$0xff] %v44
    $region17: #{tpu_custom_call.1} parent=1 // pred_fallthru
      _
    // Predicated region
    $region18: #{tpu_custom_call.1} parent=1 // pred_check
      %p46 = pneg %p33
    $region19: #{tpu_custom_call.1} parent=1 // pred_check_branch
      %48 = sbr.rel (%p46) target = $region21
    $region20: #{tpu_custom_call.1} parent=1 // pred_region
      %v49 = vld [vmem:[#allocation4] sm:$0xff]
      %v50 = vadd.f32 %v49, %v35
      %51 = vst [vmem:[#allocation4] sm:$0xff] %v50
      %v52 = vld [vmem:[#allocation5] sm:$0xff]
      %v53 = vadd.f32 %v52, %v36
      %54 = vst [vmem:[#allocation5] sm:$0xff] %v53
    $region21: #{tpu_custom_call.1} parent=1 // pred_fallthru
      _
    %p55 = por %p32, %p33
    %p56 = pneg %p55
    // Predicated region
    $region22: #{tpu_custom_call.1} parent=1 // pred_check
      _
    $region23: #{tpu_custom_call.1} parent=1 // pred_check_branch
      %58 = sbr.rel (%p55) target = $region25
    $region24: #{tpu_custom_call.1} parent=1 // pred_region
      %v59 = vlaneseq
      %v60 = vshrl.u32 %v59, 7
      %v61 = vlaneseq
      %v62 = vand.u32 %v61, 127
      %v63 = vmul.u32 %v60, 128
      %v64 = vstv %s30
      %v65 = vadd.s32 %v64, %v63
      %v66 = vadd.s32 %v65, %v62
      %vm67 = vcmp.lt.s32.totalorder %v66, 8
      %v68 = vsel %vm67, %v34, 0.0
      %v69 = vadd.f32 %v68, 0.0
      %v70 = vsel %vm67, %v29, 0.0
      %v71 = vadd.f32 %v70, 0.0
      %v72 = vld [vmem:[#allocation2] sm:$0xff]
      %v73 = vadd.f32 %v72, %v69
      %74 = vst [vmem:[#allocation2] sm:$0xff] %v73
      %v75 = vld [vmem:[#allocation3] sm:$0xff]
      %v76 = vadd.f32 %v75, %v71
      %77 = vst [vmem:[#allocation3] sm:$0xff] %v76
      %v78 = vld [vmem:[#allocation4] sm:$0xff]
      %v79 = vsub.f32 %v35, %v69
      %v80 = vadd.f32 %v78, %v79
      %81 = vst [vmem:[#allocation4] sm:$0xff] %v80
      %v82 = vld [vmem:[#allocation5] sm:$0xff]
      %v83 = vsub.f32 %v36, %v71
      %v84 = vadd.f32 %v82, %v83
      %85 = vst [vmem:[#allocation5] sm:$0xff] %v84
    $region25: #{tpu_custom_call.1} parent=1 // pred_fallthru
      _
    // Predicated region
    $region26: #{tpu_custom_call.1} parent=1 // pred_check
      %p86 = pneg %p21
    $region27: #{tpu_custom_call.1} parent=1 // pred_check_branch
      %88 = sbr.rel (%p86) target = $region29
    $region28: #{tpu_custom_call.1} parent=1 // pred_region
      %v89 = vlaneseq
      %v90 = vand.u32 %v89, 127
      %vm91 = vcmp.lt.s32.totalorder %v90, 0
      %v92 = vsub.s32 0, %v90
      %v93 = vsel %vm91, %v92, %v90
      %v94 = vshrl.u32 %v93, 1
      %v95 = vand.u32 %v93, 1
      %v96 = vsub.s32 0, %v95
      %v97 = vsel %vm91, %v96, %v95
      %vm98 = vcmp.ne.s32.totalorder %v97, 0
      %vm99 = vcmp.lt.s32.totalorder %v97, 0
      %vm100 = vmand %vm99, %vm98
      %v101 = vadd.s32 %v97, 2
      %v102 = vsel %vm100, %v101, %v97
      %vm103 = vcmp.eq.s32.totalorder %v102, 0
      %v104 = vld [vmem:[#allocation2] sm:$0xff]
      %v105 = vsel %vm103, 0.0, %v104
      %106 = vadd.xlane.f32.xlu0 %v105
      %v107 = vpop.xlane.xlu0 %106
      %v108 = vrot.slane %v107, 4
      %v109 = vadd.f32 %v107, %v108
      %v110 = vrot.slane %v109, 2
      %v111 = vadd.f32 %v109, %v110
      %v112 = vrot.slane %v111, 1
      %v113 = vadd.f32 %v111, %v112
      %s114 = vtos %v113
      %v115 = vstv %s114
      %v116 = vld [vmem:[#allocation3] sm:$0xff]
      %v117 = vsel %vm103, %v116, 0.0
      %118 = vadd.xlane.f32.xlu0 %v117
      %v119 = vpop.xlane.xlu0 %118
      %v120 = vrot.slane %v119, 4
      %v121 = vadd.f32 %v119, %v120
      %v122 = vrot.slane %v121, 2
      %v123 = vadd.f32 %v121, %v122
      %v124 = vrot.slane %v123, 1
      %v125 = vadd.f32 %v123, %v124
      %s126 = vtos %v125
      %v127 = vstv %s126
      %v128 = vld [vmem:[#allocation4] sm:$0xff]
      %v129 = vsel %vm103, %v128, 0.0
      %130 = vadd.xlane.f32.xlu0 %v129
      %v131 = vpop.xlane.xlu0 %130
      %v132 = vrot.slane %v131, 4
      %v133 = vadd.f32 %v131, %v132
      %v134 = vrot.slane %v133, 2
      %v135 = vadd.f32 %v133, %v134
      %v136 = vrot.slane %v135, 1
      %v137 = vadd.f32 %v135, %v136
      %s138 = vtos %v137
      %v139 = vstv %s138
      %v140 = vld [vmem:[#allocation5] sm:$0xff]
      %v141 = vsel %vm103, %v140, 0.0
      %142 = vadd.xlane.f32.xlu0 %v141
      %v143 = vpop.xlane.xlu0 %142
      %v144 = vrot.slane %v143, 4
      %v145 = vadd.f32 %v143, %v144
      %v146 = vrot.slane %v145, 2
      %v147 = vadd.f32 %v145, %v146
      %v148 = vrot.slane %v147, 1
      %v149 = vadd.f32 %v147, %v148
      %s150 = vtos %v149
      %v151 = vstv %s150
      %v152 = vrcp.pop 4.0
      %v153 = vmul.f32 %v115, %v152
      %v154 = vmul.f32 %v139, %v152
      %v155 = vmul.f32 %v127, %v152
      %v156 = vmul.f32 %v151, %v152
      %v157 = vsub.f32 %v155, %v156
      %v158 = vsub.f32 0.9, %v157
      %v159 = vmax.f32 %v158, 0.0
      %v160 = vmul.f32 %v154, 0.1
      %v161 = vmul.f32 %v153, 0.1
      %v162 = vadd.f32 %v160, %v161
      %v163 = vadd.f32 %v162, %v159
      %vm164 = vcmask 0
      %165 = vst.msk [vmem:[#allocation9] sm:$0x1] %vm164, %v163
    $region29: #{tpu_custom_call.1} parent=1 // pred_fallthru
      _
    // Predicated region
    $region30: #{tpu_custom_call.1} parent=1 // pred_check
      _
    $region31: #{tpu_custom_call.1} parent=1 // pred_check_branch
      %167 = sbr.rel (0) target = $region33
    $region32: #{tpu_custom_call.1} parent=1 // pred_region
      %s169 = ssub.s32 16, 16
      %170 = vsyncadd [#allocation8], %s169
      %s172 = sshll.u32 [#allocation9], 4
      %s173 = int_to_ptr.vmem [resolvable:$true] %s172
      %175 = dma.vmem_to_hbm [thread:$0]  %s173, 16, %s1, [#allocation8]
    $region33: #{tpu_custom_call.1} parent=1 // pred_fallthru
      _
    // Predicated region
    $region34: #{tpu_custom_call.1} parent=1 // pred_check
      _
    $region35: #{tpu_custom_call.1} parent=1 // pred_check_branch
      %177 = sbr.rel (0) target = $region37
    $region36: #{tpu_custom_call.1} parent=1 // pred_region
      %178 = dma.done [#allocation8], 16
    $region37: #{tpu_custom_call.1} parent=1 // pred_fallthru
      _
    %179 = vsyncpa [#allocation7], 1
    %180 = vsyncpa [#allocation8], 1

</llo_original>
